<compile_context>
chip_gen: v7x
topology: tpu7x:2x2x1
jax: 0.10.0
libtpu: 0.0.40
codegen_flags: <defaults>
</compile_context>

<pallas_src>
import functools

import jax
import jax.numpy as jnp
from jax.experimental import pallas as pl
from jax.experimental.pallas import tpu as pltpu


def _round_up(x, m):
    return ((x + m - 1) // m) * m


# ----------------------------------------------------------------------------
# Kernels
# ----------------------------------------------------------------------------
def _mlp_tanh(x_ref, w1_ref, w2_ref, wm_ref, bcat_ref, h_pad, a_pad):
    """Shared body: 3-layer MLP (relu, relu, tanh), f32 accumulation."""
    cdt = w1_ref.dtype                      # compute dtype of the MXU operands
    x = x_ref[...]

    # Coalesced biases: [b1 | b2 | bm], each segment 128-lane aligned.
    b1 = bcat_ref[:, 0:h_pad]
    b2 = bcat_ref[:, h_pad:2 * h_pad]
    bm = bcat_ref[:, 2 * h_pad:2 * h_pad + a_pad]

    h = jnp.dot(x.astype(cdt), w1_ref[...], preferred_element_type=jnp.float32) + b1
    h = jnp.maximum(h, 0.0)
    h = jnp.dot(h.astype(cdt), w2_ref[...], preferred_element_type=jnp.float32) + b2
    h = jnp.maximum(h, 0.0)
    m = jnp.dot(h.astype(cdt), wm_ref[...], preferred_element_type=jnp.float32) + bm
    return jnp.tanh(m)


def _policy_kernel(x_ref, w1_ref, w2_ref, wm_ref, bcat_ref, out_ref, *, h_pad, a_pad):
    # Default action_space=None path: scale/bias statically elided.
    out_ref[...] = _mlp_tanh(x_ref, w1_ref, w2_ref, wm_ref, bcat_ref,
                             h_pad, a_pad).astype(out_ref.dtype)


def _policy_kernel_affine(x_ref, w1_ref, w2_ref, wm_ref, bcat_ref, sb_ref, out_ref,
                          *, h_pad, a_pad):
    m = _mlp_tanh(x_ref, w1_ref, w2_ref, wm_ref, bcat_ref, h_pad, a_pad)
    # sb_ref: row 0 = per-action scale, row 1 = per-action bias (lane-padded).
    out_ref[...] = (m * sb_ref[0:1, :] + sb_ref[1:2, :]).astype(out_ref.dtype)


# ----------------------------------------------------------------------------
# Wrapper
# ----------------------------------------------------------------------------
def prepare_params(params, weights_dtype=jnp.bfloat16):
    """Pad dims (state->16, hidden/action->128), cast weights to bf16, coalesce
    biases.  Done once (outside the rollout hot loop)."""
    w1, b1, w2, b2, wm, bm = params
    state_dim, hidden = w1.shape
    num_actions = wm.shape[1]
    s_pad = _round_up(state_dim, 16)          # bf16 sublane packing on w1's K dim
    h_pad = _round_up(hidden, 128)
    a_pad = _round_up(num_actions, 128)

    w1p = jnp.zeros((s_pad, h_pad), weights_dtype).at[:state_dim, :hidden].set(
        w1.astype(weights_dtype))
    w2p = jnp.zeros((h_pad, h_pad), weights_dtype).at[:hidden, :hidden].set(
        w2.astype(weights_dtype))
    wmp = jnp.zeros((h_pad, a_pad), weights_dtype).at[:hidden, :num_actions].set(
        wm.astype(weights_dtype))

    bcat = jnp.zeros((1, 2 * h_pad + a_pad), jnp.float32)
    bcat = bcat.at[0, 0:hidden].set(b1.astype(jnp.float32))
    bcat = bcat.at[0, h_pad:h_pad + hidden].set(b2.astype(jnp.float32))
    bcat = bcat.at[0, 2 * h_pad:2 * h_pad + num_actions].set(bm.astype(jnp.float32))

    return dict(w1=w1p, w2=w2p, wm=wmp, bcat=bcat,
                state_dim=state_dim, num_actions=num_actions,
                s_pad=s_pad, h_pad=h_pad, a_pad=a_pad)


def deterministic_policy_forward(state, prepared, action_scale=1.0, action_bias=0.0,
                                 batch_tile=1024, out_dtype=jnp.float32):
    """state: (B, state_dim) f32.  Returns mean action (B, num_actions) out_dtype."""
    B, S = state.shape
    assert S == prepared["state_dim"]
    s_pad, h_pad, a_pad = prepared["s_pad"], prepared["h_pad"], prepared["a_pad"]
    num_actions = prepared["num_actions"]

    # Only pad state columns if state_dim was not already 16-aligned (rare; the
    # batch dimension is never padded -- Pallas handles the partial edge block).
    x = state if S == s_pad else jnp.pad(state, ((0, 0), (0, s_pad - S)))

    # Batch tile: multiple of 16 (bf16 MXU LHS sublane packing).  Large default
    # amortizes the ~0.35 us/grid-step overhead and the MXU RHS (weight) pushes.
    tb = _round_up(min(batch_tile, _round_up(B, 16)), 16)
    # v7x has 2 TensorCores; "parallel" shards grid steps across them, so make
    # sure the grid has >= 2 steps whenever the batch is big enough to split.
    if pl.cdiv(B, tb) == 1 and B > 16:
        tb = _round_up(pl.cdiv(B, 2), 16)
    grid = (pl.cdiv(B, tb),)

    # Grid-invariant operands: single-buffered (constant index_map => the second
    # pipeline buffer would be pure VMEM waste).
    resident = pl.Buffered(1)
    in_specs = [
        pl.BlockSpec((tb, s_pad), lambda i: (i, 0)),                 # batch-tiled state
        pl.BlockSpec(prepared["w1"].shape, lambda i: (0, 0), pipeline_mode=resident),
        pl.BlockSpec(prepared["w2"].shape, lambda i: (0, 0), pipeline_mode=resident),
        pl.BlockSpec(prepared["wm"].shape, lambda i: (0, 0), pipeline_mode=resident),
        pl.BlockSpec(prepared["bcat"].shape, lambda i: (0, 0), pipeline_mode=resident),
    ]
    args = [x, prepared["w1"], prepared["w2"], prepared["wm"], prepared["bcat"]]

    # Static elision of the affine epilogue for the action_space=None default.
    # (Note: a *traced* scale==1.0 takes the affine path -- correct, just slower.)
    is_default = (isinstance(action_scale, (int, float))
                  and isinstance(action_bias, (int, float))
                  and float(action_scale) == 1.0 and float(action_bias) == 0.0)
    if is_default:
        kernel = functools.partial(_policy_kernel, h_pad=h_pad, a_pad=a_pad)
    else:
        scale = jnp.zeros((a_pad,), jnp.float32).at[:num_actions].set(
            jnp.broadcast_to(jnp.asarray(action_scale, jnp.float32), (num_actions,)))
        bias = jnp.zeros((a_pad,), jnp.float32).at[:num_actions].set(
            jnp.broadcast_to(jnp.asarray(action_bias, jnp.float32), (num_actions,)))
        sb = jnp.stack([scale, bias], axis=0)                        # (2, a_pad)
        in_specs.append(pl.BlockSpec(sb.shape, lambda i: (0, 0), pipeline_mode=resident))
        args.append(sb)
        kernel = functools.partial(_policy_kernel_affine, h_pad=h_pad, a_pad=a_pad)

    out_bytes = jnp.dtype(out_dtype).itemsize
    w_bytes = sum(int(prepared[k].size) * prepared[k].dtype.itemsize
                  for k in ("w1", "w2", "wm", "bcat"))
    # Resident weights (1x) + double-buffered state/out tiles + f32 intermediates.
    needed = (w_bytes
              + 2 * tb * s_pad * 4 + 2 * tb * a_pad * out_bytes
              + 3 * tb * h_pad * 4 + tb * a_pad * 4)
    vmem_limit = None
    if needed > (24 << 20):       # only override when the default scoped cap may bind
        vmem_limit = int(min(needed * 3 // 2 + (2 << 20), 100 << 20))

    cost = pl.CostEstimate(
        flops=2 * B * (s_pad * h_pad + h_pad * h_pad + h_pad * a_pad),
        transcendentals=B * a_pad,
        bytes_accessed=B * s_pad * 4 + B * a_pad * out_bytes + w_bytes,
    )

    out = pl.pallas_call(
        kernel,
        out_shape=jax.ShapeDtypeStruct((B, a_pad), out_dtype),
        grid=grid,
        in_specs=in_specs,
        out_specs=pl.BlockSpec((tb, a_pad), lambda i: (i, 0)),       # lane-dense stores
        compiler_params=pltpu.CompilerParams(
            dimension_semantics=("parallel",),                       # v7x: 2-TC sharding
            vmem_limit_bytes=vmem_limit),
        cost_estimate=cost,
    )(*args)

    # Hot-loop callers that can consume the 128-lane padded layout should skip
    # this column slice (extra HBM pass); the public API returns num_actions cols.
    return out[:, :num_actions]


# ----------------------------------------------------------------------------
# Init + reference
# ----------------------------------------------------------------------------
def _xavier_uniform(key, fan_in, fan_out, gain=1.0):
    limit = gain * jnp.sqrt(6.0 / (fan_in + fan_out))
    return jax.random.uniform(key, (fan_in, fan_out), jnp.float32, -limit, limit)


def init_params(key, state_dim, num_actions, hidden_dim):
    k1, k2, k3 = jax.random.split(key, 3)
    w1 = _xavier_uniform(k1, state_dim, hidden_dim)
    b1 = jnp.zeros((hidden_dim,), jnp.float32)
    w2 = _xavier_uniform(k2, hidden_dim, hidden_dim)
    b2 = jnp.zeros((hidden_dim,), jnp.float32)
    wm = _xavier_uniform(k3, hidden_dim, num_actions)
    bm = jnp.zeros((num_actions,), jnp.float32)
    return (w1, b1, w2, b2, wm, bm)


def _reference(state, params, weights_dtype=jnp.bfloat16,
               action_scale=1.0, action_bias=0.0):
    w1, b1, w2, b2, wm, bm = params

    def mm(x, w):
        return jnp.dot(x.astype(weights_dtype), w.astype(weights_dtype),
                       preferred_element_type=jnp.float32)

    h = jax.nn.relu(mm(state, w1) + b1)
    h = jax.nn.relu(mm(h, w2) + b2)
    return jnp.tanh(mm(h, wm) + bm) * action_scale + action_bias


def _reference_f32(state, params):
    w1, b1, w2, b2, wm, bm = params
    h = jax.nn.relu(state @ w1 + b1)
    h = jax.nn.relu(h @ w2 + b2)
    return jnp.tanh(h @ wm + bm)


if __name__ == "__main__":
    key = jax.random.PRNGKey(0)
    k_param, k_state = jax.random.split(key)

    B, state_dim, num_actions, hidden_dim = 2, 16, 8, 32
    params = init_params(k_param, state_dim, num_actions, hidden_dim)
    state = jax.random.normal(k_state, (B, state_dim), jnp.float32)

    prepared = prepare_params(params)

    # Default path (action_space=None): affine epilogue statically elided.
    mean = deterministic_policy_forward(state, prepared)
    mean = jax.block_until_ready(mean)
    assert mean.shape == (B, num_actions)
    assert jnp.allclose(mean, _reference(state, params), atol=1e-4, rtol=1e-4), \
        "mismatch vs bf16 reference"
    assert jnp.allclose(mean, _reference_f32(state, params), atol=3e-2, rtol=3e-2), \
        "mismatch vs f32 reference"

    # Non-default action_space path (per-action scale/bias), affine kernel variant.
    scale2, bias2 = 2.0, 0.5
    mean2 = deterministic_policy_forward(state, prepared,
                                         action_scale=scale2, action_bias=bias2)
    mean2 = jax.block_until_ready(mean2)
    ref2 = _reference(state, params, action_scale=scale2, action_bias=bias2)
    assert jnp.allclose(mean2, ref2, atol=1e-4, rtol=1e-4), "mismatch (affine path)"

    # Larger, non-tile-aligned batch exercises the cdiv grid + partial edge block
    # and the >=2-step split for v7x.
    B3 = 300
    state3 = jax.random.normal(jax.random.PRNGKey(3), (B3, state_dim), jnp.float32)
    mean3 = jax.block_until_ready(deterministic_policy_forward(state3, prepared))
    assert mean3.shape == (B3, num_actions)
    assert jnp.allclose(mean3, _reference(state3, params), atol=1e-4, rtol=1e-4), \
        "mismatch (large batch)"

    # TODO(synk): sample() uses torch's stateful .normal_ RNG; not reproduced here
    # (forward() is the kernel hot path).
    print("KERNEL_OK")
</pallas_src>

<mosaic_0001>
module attributes {stable_mosaic.version = 11 : i64} {
  func.func @_policy_kernel(%arg0: i32, %arg1: memref<16x16xf32, #tpu.memory_space<vmem>>, %arg2: memref<16x128xbf16, #tpu.memory_space<vmem>>, %arg3: memref<128x128xbf16, #tpu.memory_space<vmem>>, %arg4: memref<128x128xbf16, #tpu.memory_space<vmem>>, %arg5: memref<1x384xf32, #tpu.memory_space<vmem>>, %arg6: memref<16x128xf32, #tpu.memory_space<vmem>>) attributes {dimension_semantics = [#tpu.dimension_semantics<parallel>], iteration_bounds = array<i64: 1>, scalar_prefetch = 0 : i64, scratch_operands = 0 : i64, tpu.core_type = #tpu.core_type<tc>, window_params = [{transform_indices = @transform_0, window_bounds = array<i64: 16, 16>}, {pipeline_mode = #tpu.pipeline_mode<synchronous>, transform_indices = @transform_1, window_bounds = array<i64: 16, 128>}, {pipeline_mode = #tpu.pipeline_mode<synchronous>, transform_indices = @transform_2, window_bounds = array<i64: 128, 128>}, {pipeline_mode = #tpu.pipeline_mode<synchronous>, transform_indices = @transform_3, window_bounds = array<i64: 128, 128>}, {pipeline_mode = #tpu.pipeline_mode<synchronous>, transform_indices = @transform_4, window_bounds = array<i64: 1, 384>}, {transform_indices = @transform_5, window_bounds = array<i64: 16, 128>}]} {
    %c0 = arith.constant 0 : index
    %c0_0 = arith.constant 0 : index
    %0 = vector.load %arg1[%c0, %c0_0] : memref<16x16xf32, #tpu.memory_space<vmem>>, vector<16x16xf32>
    %c0_1 = arith.constant 0 : index
    %c0_2 = arith.constant 0 : index
    %1 = vector.load %arg5[%c0_1, %c0_2] : memref<1x384xf32, #tpu.memory_space<vmem>>, vector<1x128xf32>
    %c0_3 = arith.constant 0 : index
    %c128 = arith.constant 128 : index
    %2 = vector.load %arg5[%c0_3, %c128] : memref<1x384xf32, #tpu.memory_space<vmem>>, vector<1x128xf32>
    %c0_4 = arith.constant 0 : index
    %c256 = arith.constant 256 : index
    %3 = vector.load %arg5[%c0_4, %c256] : memref<1x384xf32, #tpu.memory_space<vmem>>, vector<1x128xf32>
    %4 = arith.truncf %0 : vector<16x16xf32> to vector<16x16xbf16>
    %c0_5 = arith.constant 0 : index
    %c0_6 = arith.constant 0 : index
    %5 = vector.load %arg2[%c0_5, %c0_6] : memref<16x128xbf16, #tpu.memory_space<vmem>>, vector<16x128xbf16>
    %cst = arith.constant dense<0.000000e+00> : vector<16x128xf32>
    %6 = tpu.matmul %4, %5, %cst {dimension_numbers = #tpu.dot_dimension_numbers<[1], [0], [0], [1], [0, 0, 1, 1], [], []>} : vector<16x16xbf16>, vector<16x128xbf16>, vector<16x128xf32> -> vector<16x128xf32>
    %7 = vector.broadcast %1 : vector<1x128xf32> to vector<16x128xf32>
    %8 = arith.addf %6, %7 : vector<16x128xf32>
    %cst_7 = arith.constant 0.000000e+00 : f32
    %9 = vector.broadcast %cst_7 : f32 to vector<16x128xf32>
    %10 = arith.maximumf %8, %9 : vector<16x128xf32>
    %11 = arith.truncf %10 : vector<16x128xf32> to vector<16x128xbf16>
    %c0_8 = arith.constant 0 : index
    %c0_9 = arith.constant 0 : index
    %12 = vector.load %arg3[%c0_8, %c0_9] : memref<128x128xbf16, #tpu.memory_space<vmem>>, vector<128x128xbf16>
    %cst_10 = arith.constant dense<0.000000e+00> : vector<16x128xf32>
    %13 = tpu.matmul %11, %12, %cst_10 {dimension_numbers = #tpu.dot_dimension_numbers<[1], [0], [0], [1], [0, 0, 1, 1], [], []>} : vector<16x128xbf16>, vector<128x128xbf16>, vector<16x128xf32> -> vector<16x128xf32>
    %14 = vector.broadcast %2 : vector<1x128xf32> to vector<16x128xf32>
    %15 = arith.addf %13, %14 : vector<16x128xf32>
    %cst_11 = arith.constant 0.000000e+00 : f32
    %16 = vector.broadcast %cst_11 : f32 to vector<16x128xf32>
    %17 = arith.maximumf %15, %16 : vector<16x128xf32>
    %18 = arith.truncf %17 : vector<16x128xf32> to vector<16x128xbf16>
    %c0_12 = arith.constant 0 : index
    %c0_13 = arith.constant 0 : index
    %19 = vector.load %arg4[%c0_12, %c0_13] : memref<128x128xbf16, #tpu.memory_space<vmem>>, vector<128x128xbf16>
    %cst_14 = arith.constant dense<0.000000e+00> : vector<16x128xf32>
    %20 = tpu.matmul %18, %19, %cst_14 {dimension_numbers = #tpu.dot_dimension_numbers<[1], [0], [0], [1], [0, 0, 1, 1], [], []>} : vector<16x128xbf16>, vector<128x128xbf16>, vector<16x128xf32> -> vector<16x128xf32>
    %21 = vector.broadcast %3 : vector<1x128xf32> to vector<16x128xf32>
    %22 = arith.addf %20, %21 : vector<16x128xf32>
    %23 = math.tanh %22 : vector<16x128xf32>
    %c0_15 = arith.constant 0 : index
    %c0_16 = arith.constant 0 : index
    %24 = vector.load %arg6[%c0_15, %c0_16] : memref<16x128xf32, #tpu.memory_space<vmem>>, vector<16x128xf32>
    tpu.vector_store %arg6[%c0_15, %c0_16], %23 {strides = array<i32>} : memref<16x128xf32, #tpu.memory_space<vmem>>, vector<16x128xf32>,
    return
  }
  func.func @transform_0(%arg0: i32) -> (i32, i32) {
    %c0_i32 = arith.constant 0 : i32
    %c0_i32_0 = arith.constant 0 : i32
    return %arg0, %c0_i32 : i32, i32
  }
  func.func @transform_1(%arg0: i32) -> (i32, i32) {
    %c0_i32 = arith.constant 0 : i32
    %c0_i32_0 = arith.constant 0 : i32
    %c0_i32_1 = arith.constant 0 : i32
    return %c0_i32, %c0_i32_0 : i32, i32
  }
  func.func @transform_2(%arg0: i32) -> (i32, i32) {
    %c0_i32 = arith.constant 0 : i32
    %c0_i32_0 = arith.constant 0 : i32
    %c0_i32_1 = arith.constant 0 : i32
    return %c0_i32, %c0_i32_0 : i32, i32
  }
  func.func @transform_3(%arg0: i32) -> (i32, i32) {
    %c0_i32 = arith.constant 0 : i32
    %c0_i32_0 = arith.constant 0 : i32
    %c0_i32_1 = arith.constant 0 : i32
    return %c0_i32, %c0_i32_0 : i32, i32
  }
  func.func @transform_4(%arg0: i32) -> (i32, i32) {
    %c0_i32 = arith.constant 0 : i32
    %c0_i32_0 = arith.constant 0 : i32
    %c0_i32_1 = arith.constant 0 : i32
    return %c0_i32, %c0_i32_0 : i32, i32
  }
  func.func @transform_5(%arg0: i32) -> (i32, i32) {
    %c0_i32 = arith.constant 0 : i32
    %c0_i32_0 = arith.constant 0 : i32
    return %arg0, %c0_i32 : i32, i32
  }
}

</mosaic_0001>

<llo_original>
// kernel: tpu_custom_call.1
$region0: #{tpu_custom_call.1}
  #allocation0 [shape = 'u32[]', space=smem, size = 0x4, offset = 0x4, fixed_abs, tag = 'smem constant byte address 0x4 - core index']
  #allocation1 [shape = 'u32[144,128]{1,0:T(1,128)}', space=vmem, size = 0x12000, scoped, tag = 'internal scratch']
  %s0 = inlined_call_operand.hbm [shape: f32[2,16], index: 0, kind: input, shape index: {}]
  %s1 = inlined_call_operand.hbm [shape: bf16[16,128], index: 1, kind: input, shape index: {}]
  %s2 = inlined_call_operand.hbm [shape: bf16[128,128], index: 2, kind: input, shape index: {}]
  %s3 = inlined_call_operand.hbm [shape: bf16[128,128], index: 3, kind: input, shape index: {}]
  %s4 = inlined_call_operand.vmem [shape: f32[1,384], index: 4, kind: input, shape index: {}]
  %s5 = inlined_call_operand.hbm [shape: f32[2,128], index: 5, kind: output, shape index: {}]
  %s6 = sld [smem:[#allocation0]]
  $region46: #{tpu_custom_call.1} parent=0
    _
  %s8 = ssub.s32 1, %s6
  %s9 = scalar_select 0, %s8, %s6
  $region1: #{tpu_custom_call.1} parent=0
    #allocation2 [shape = 'u8[8192]{0}', space=vmem, size = 0x2000, scoped, tag = 'input window, operand 0, single buffered']
    #allocation3 [shape = 's32[1]{0}', space=sflag, size = 0x4, scoped, tag = 'scoped memory for tpu_custom_call.1']
    #allocation4 [shape = 's32[1]{0}', space=sflag, size = 0x4, scoped, tag = 'scoped memory for tpu_custom_call.1']
    #allocation5 [shape = 'u8[4096]{0}', space=vmem, size = 0x1000, scoped, tag = 'input window, operand 1, single buffered']
    #allocation6 [shape = 's32[1]{0}', space=sflag, size = 0x4, scoped, tag = 'scoped memory for tpu_custom_call.1']
    #allocation7 [shape = 'u8[32768]{0}', space=vmem, size = 0x8000, scoped, tag = 'input window, operand 2, single buffered']
    #allocation8 [shape = 'u8[32768]{0}', space=vmem, size = 0x8000, scoped, tag = 'input window, operand 3, single buffered']
    #allocation9 [shape = 's32[1]{0}', space=sflag, size = 0x4, scoped, tag = 'scoped memory for tpu_custom_call.1']
    #allocation10 [shape = 'u8[8192]{0}', space=vmem, size = 0x2000, scoped, tag = 'output window, operand 0, single buffered']
    %10 = vsyncpa [#allocation3], 0
    %11 = vsyncpa [#allocation6], 0
    %12 = vsyncpa [#allocation9], 0
    %13 = vsyncpa [#allocation4], 0
    // Predicated region
    $region2: #{tpu_custom_call.1} parent=1 // pred_check
      _
    $region3: #{tpu_custom_call.1} parent=1 // pred_check_branch
      %15 = sbr.rel (0) target = $region5
    $region4: #{tpu_custom_call.1} parent=1 // pred_region
      %s17 = ssub.s32 256, 32
      %18 = vsyncadd [#allocation3], %s17
      %s19 = sshll.u32 [#allocation2], 4
      %s20 = int_to_ptr.vmem [resolvable:$true] %s19
      %25 = dma.hbm_to_vmem [thread:$0]  %s0, 32, %s20, [#allocation3], 32, 32, 2
    $region5: #{tpu_custom_call.1} parent=1 // pred_fallthru
      _
    // Predicated region
    $region6: #{tpu_custom_call.1} parent=1 // pred_check
      _
    $region7: #{tpu_custom_call.1} parent=1 // pred_check_branch
      %27 = sbr.rel (0) target = $region9
    $region8: #{tpu_custom_call.1} parent=1 // pred_region
      %s29 = ssub.s32 128, 128
      %30 = vsyncadd [#allocation6], %s29
      %s31 = sshll.u32 [#allocation5], 4
      %s32 = int_to_ptr.vmem [resolvable:$true] %s31
      %37 = dma.hbm_to_vmem [thread:$0]  %s1, 128, %s32, [#allocation6], 64, 64, 4
    $region9: #{tpu_custom_call.1} parent=1 // pred_fallthru
      _
    // Predicated region
    $region10: #{tpu_custom_call.1} parent=1 // pred_check
      _
    $region11: #{tpu_custom_call.1} parent=1 // pred_check_branch
      %39 = sbr.rel (0) target = $region13
    $region12: #{tpu_custom_call.1} parent=1 // pred_region
      %s41 = ssub.s32 1024, 1024
      %42 = vsyncadd [#allocation6], %s41
      %s43 = sshll.u32 [#allocation7], 4
      %s44 = int_to_ptr.vmem [resolvable:$true] %s43
      %49 = dma.hbm_to_vmem [thread:$0]  %s2, 1024, %s44, [#allocation6], 64, 64, 4
    $region13: #{tpu_custom_call.1} parent=1 // pred_fallthru
      _
    // Predicated region
    $region14: #{tpu_custom_call.1} parent=1 // pred_check
      _
    $region15: #{tpu_custom_call.1} parent=1 // pred_check_branch
      %51 = sbr.rel (0) target = $region17
    $region16: #{tpu_custom_call.1} parent=1 // pred_region
      %s53 = ssub.s32 1024, 1024
      %54 = vsyncadd [#allocation9], %s53
      %s55 = sshll.u32 [#allocation8], 4
      %s56 = int_to_ptr.vmem [resolvable:$true] %s55
      %61 = dma.hbm_to_vmem [thread:$0]  %s3, 1024, %s56, [#allocation9], 64, 64, 4
    $region17: #{tpu_custom_call.1} parent=1 // pred_fallthru
      _
    // Predicated region
    $region18: #{tpu_custom_call.1} parent=1 // pred_check
      _
    $region19: #{tpu_custom_call.1} parent=1 // pred_check_branch
      %63 = sbr.rel (0) target = $region21
    $region20: #{tpu_custom_call.1} parent=1 // pred_region
      _
    $region21: #{tpu_custom_call.1} parent=1 // pred_fallthru
      _
    // Predicated region
    $region22: #{tpu_custom_call.1} parent=1 // pred_check
      _
    $region23: #{tpu_custom_call.1} parent=1 // pred_check_branch
      %65 = sbr.rel (0) target = $region25
    $region24: #{tpu_custom_call.1} parent=1 // pred_region
      %66 = dma.done [#allocation3], 256
    $region25: #{tpu_custom_call.1} parent=1 // pred_fallthru
      _
    // Predicated region
    $region26: #{tpu_custom_call.1} parent=1 // pred_check
      _
    $region27: #{tpu_custom_call.1} parent=1 // pred_check_branch
      %68 = sbr.rel (0) target = $region29
    $region28: #{tpu_custom_call.1} parent=1 // pred_region
      %69 = dma.done [#allocation6], 128
    $region29: #{tpu_custom_call.1} parent=1 // pred_fallthru
      _
    // Predicated region
    $region30: #{tpu_custom_call.1} parent=1 // pred_check
      _
    $region31: #{tpu_custom_call.1} parent=1 // pred_check_branch
      %71 = sbr.rel (0) target = $region33
    $region32: #{tpu_custom_call.1} parent=1 // pred_region
      %72 = dma.done [#allocation6], 1024
    $region33: #{tpu_custom_call.1} parent=1 // pred_fallthru
      _
    // Predicated region
    $region34: #{tpu_custom_call.1} parent=1 // pred_check
      _
    $region35: #{tpu_custom_call.1} parent=1 // pred_check_branch
      %74 = sbr.rel (0) target = $region37
    $region36: #{tpu_custom_call.1} parent=1 // pred_region
      %75 = dma.done [#allocation9], 1024
    $region37: #{tpu_custom_call.1} parent=1 // pred_fallthru
      _
    %v77 = vld [vmem:[#allocation2] sm:$0xff]
    %v78 = vld [vmem:[#allocation2 + $0x8] sm:$0xff]
    %v79 = vld [vmem:[%s4] sm:$0x1]
    %v80 = vld [vmem:[%s4 + $0x1] sm:$0x1]
    %v81 = vld [vmem:[%s4 + $0x2] sm:$0x1]
    %v82 = vpack.c.bf16 %v78, %v77
    %v83 = vld [vmem:[#allocation5] sm:$0xf]
    %v84 = vld [vmem:[#allocation5 + $0x4] sm:$0xf]
    %v86 = vlaneseq
    %v87 = vshrl.u32 %v86, 7
    %v88 = vsub.s32 0, %v87
    %v89 = vrot.slane %v79, %v88
    %v93 = vunpack.c.l.b16 %v83
    %v94 = vunpack.c.l.b16 %v84
    %v95 = vpack.c.b16 %v94, %v93
    %vm97 = vcmask 130048
    %v99 = vsel %vm97, %v82, 0
    %101 = vmatprep.subr.bf16.mxu0 0
    %102 = vmatpush1.bf16.msra.mxu0 %v95
    %103 = vmatprep.subr.bf16.mxu0 0
    %104 = vmatpush1.bf16.msra.mxu0 0
    %105 = vmatprep.subr.bf16.mxu0 0
    %106 = vmatpush1.bf16.msra.mxu0 0
    %107 = vmatprep.subr.bf16.mxu0 0
    %108 = vmatpush1.bf16.msra.mxu0 0
    %109 = vmatprep.subr.bf16.mxu0 0
    %110 = vmatpush1.bf16.msra.mxu0 0
    %111 = vmatprep.subr.bf16.mxu0 0
    %112 = vmatpush1.bf16.msra.mxu0 0
    %113 = vmatprep.subr.bf16.mxu0 0
    %114 = vmatpush1.bf16.msra.mxu0 0
    %115 = vmatprep.subr.bf16.mxu0 0
    %116 = vmatpush1.bf16.msra.mxu0 0
    %117 = vmatprep.subr.bf16.mxu0 0
    %118 = vmatpush1.bf16.msra.mxu0 0
    %119 = vmatprep.subr.bf16.mxu0 0
    %120 = vmatpush1.bf16.msra.mxu0 0
    %121 = vmatprep.subr.bf16.mxu0 0
    %122 = vmatpush1.bf16.msra.mxu0 0
    %123 = vmatprep.subr.bf16.mxu0 0
    %124 = vmatpush1.bf16.msra.mxu0 0
    %125 = vmatprep.subr.bf16.mxu0 0
    %126 = vmatpush1.bf16.msra.mxu0 0
    %127 = vmatprep.subr.bf16.mxu0 0
    %128 = vmatpush1.bf16.msra.mxu0 0
    %129 = vmatprep.subr.bf16.mxu0 0
    %130 = vmatpush1.bf16.msra.mxu0 0
    %131 = vmatprep.subr.bf16.mxu0 0
    %132 = vmatpush1.bf16.msra.mxu0 0
    %133 = vmatprep.mubr.bf16.mxu0 0
    %134 = vmatmul.mubr.bf16.gmra.mrb[0].mxu0 %v99
    %v135 = vpop.f32.mrb[0].mxu0
    %v136 = vadd.f32 %v89, %v135
    %v137 = vpop.f32.mrb[0].mxu0
    %v138 = vpop.f32.mrb[0].mxu0
    %v139 = vadd.f32 %v89, %v138
    %v140 = vpop.f32.mrb[0].mxu0
    %141 = vdwg.mxu0
    %v142 = vmax.f32 %v136, 0.0
    %v143 = vmax.f32 %v139, 0.0
    %v144 = vpack.c.bf16 %v143, %v142
    %v145 = vld [vmem:[#allocation7] sm:$0xf]
    %v146 = vld [vmem:[#allocation7 + $0x4] sm:$0xf]
    %v147 = vld [vmem:[#allocation7 + $0x8] sm:$0xf]
    %v148 = vld [vmem:[#allocation7 + $0xc] sm:$0xf]
    %v149 = vld [vmem:[#allocation7 + $0x10] sm:$0xf]
    %v150 = vld [vmem:[#allocation7 + $0x14] sm:$0xf]
    %v151 = vld [vmem:[#allocation7 + $0x18] sm:$0xf]
    %v152 = vld [vmem:[#allocation7 + $0x1c] sm:$0xf]
    %v153 = vld [vmem:[#allocation7 + $0x20] sm:$0xf]
    %v154 = vld [vmem:[#allocation7 + $0x24] sm:$0xf]
    %v155 = vld [vmem:[#allocation7 + $0x28] sm:$0xf]
    %v156 = vld [vmem:[#allocation7 + $0x2c] sm:$0xf]
    %v157 = vld [vmem:[#allocation7 + $0x30] sm:$0xf]
    %v158 = vld [vmem:[#allocation7 + $0x34] sm:$0xf]
    %v159 = vld [vmem:[#allocation7 + $0x38] sm:$0xf]
    %v160 = vld [vmem:[#allocation7 + $0x3c] sm:$0xf]
    %v162 = vlaneseq
    %v163 = vshrl.u32 %v162, 7
    %v164 = vsub.s32 0, %v163
    %v165 = vrot.slane %v80, %v164
    %v183 = vunpack.c.l.b16 %v145
    %v184 = vunpack.c.l.b16 %v146
    %v185 = vunpack.c.l.b16 %v147
    %v186 = vunpack.c.l.b16 %v148
    %v187 = vunpack.c.l.b16 %v149
    %v188 = vunpack.c.l.b16 %v150
    %v189 = vunpack.c.l.b16 %v151
    %v190 = vunpack.c.l.b16 %v152
    %v191 = vunpack.c.l.b16 %v153
    %v192 = vunpack.c.l.b16 %v154
    %v193 = vunpack.c.l.b16 %v155
    %v194 = vunpack.c.l.b16 %v156
    %v195 = vunpack.c.l.b16 %v157
    %v196 = vunpack.c.l.b16 %v158
    %v197 = vunpack.c.l.b16 %v159
    %v198 = vunpack.c.l.b16 %v160
    %v199 = vpack.c.b16 %v184, %v183
    %v200 = vpack.c.b16 %v186, %v185
    %v201 = vpack.c.b16 %v188, %v187
    %v202 = vpack.c.b16 %v190, %v189
    %v203 = vpack.c.b16 %v192, %v191
    %v204 = vpack.c.b16 %v194, %v193
    %v205 = vpack.c.b16 %v196, %v195
    %v206 = vpack.c.b16 %v198, %v197
    %215 = vmatprep.subr.bf16.mxu0 0
    %216 = vmatpush1.bf16.msra.mxu0 %v199
    %217 = vmatprep.subr.bf16.mxu0 0
    %218 = vmatpush1.bf16.msra.mxu0 %v200
    %219 = vmatprep.subr.bf16.mxu0 0
    %220 = vmatpush1.bf16.msra.mxu0 %v201
    %221 = vmatprep.subr.bf16.mxu0 0
    %222 = vmatpush1.bf16.msra.mxu0 %v202
    %223 = vmatprep.subr.bf16.mxu0 0
    %224 = vmatpush1.bf16.msra.mxu0 %v203
    %225 = vmatprep.subr.bf16.mxu0 0
    %226 = vmatpush1.bf16.msra.mxu0 %v204
    %227 = vmatprep.subr.bf16.mxu0 0
    %228 = vmatpush1.bf16.msra.mxu0 %v205
    %229 = vmatprep.subr.bf16.mxu0 0
    %230 = vmatpush1.bf16.msra.mxu0 %v206
    %231 = vmatprep.subr.bf16.mxu0 0
    %232 = vmatpush1.bf16.msra.mxu0 0
    %233 = vmatprep.subr.bf16.mxu0 0
    %234 = vmatpush1.bf16.msra.mxu0 0
    %235 = vmatprep.subr.bf16.mxu0 0
    %236 = vmatpush1.bf16.msra.mxu0 0
    %237 = vmatprep.subr.bf16.mxu0 0
    %238 = vmatpush1.bf16.msra.mxu0 0
    %239 = vmatprep.subr.bf16.mxu0 0
    %240 = vmatpush1.bf16.msra.mxu0 0
    %241 = vmatprep.subr.bf16.mxu0 0
    %242 = vmatpush1.bf16.msra.mxu0 0
    %243 = vmatprep.subr.bf16.mxu0 0
    %244 = vmatpush1.bf16.msra.mxu0 0
    %245 = vmatprep.subr.bf16.mxu0 0
    %246 = vmatpush1.bf16.msra.mxu0 0
    %247 = vmatprep.mubr.bf16.mxu0 0
    %248 = vmatmul.mubr.bf16.gmra.mrb[0].mxu0 %v144
    %v249 = vpop.f32.mrb[0].mxu0
    %v250 = vadd.f32 %v165, %v249
    %v251 = vpop.f32.mrb[0].mxu0
    %v252 = vpop.f32.mrb[0].mxu0
    %v253 = vadd.f32 %v165, %v252
    %v254 = vpop.f32.mrb[0].mxu0
    %255 = vdwg.mxu0
    %v256 = vmax.f32 %v250, 0.0
    %v257 = vmax.f32 %v253, 0.0
    %v258 = vpack.c.bf16 %v257, %v256
    %v259 = vld [vmem:[#allocation8] sm:$0xf]
    %v260 = vld [vmem:[#allocation8 + $0x4] sm:$0xf]
    %v261 = vld [vmem:[#allocation8 + $0x8] sm:$0xf]
    %v262 = vld [vmem:[#allocation8 + $0xc] sm:$0xf]
    %v263 = vld [vmem:[#allocation8 + $0x10] sm:$0xf]
    %v264 = vld [vmem:[#allocation8 + $0x14] sm:$0xf]
    %v265 = vld [vmem:[#allocation8 + $0x18] sm:$0xf]
    %v266 = vld [vmem:[#allocation8 + $0x1c] sm:$0xf]
    %v267 = vld [vmem:[#allocation8 + $0x20] sm:$0xf]
    %v268 = vld [vmem:[#allocation8 + $0x24] sm:$0xf]
    %v269 = vld [vmem:[#allocation8 + $0x28] sm:$0xf]
    %v270 = vld [vmem:[#allocation8 + $0x2c] sm:$0xf]
    %v271 = vld [vmem:[#allocation8 + $0x30] sm:$0xf]
    %v272 = vld [vmem:[#allocation8 + $0x34] sm:$0xf]
    %v273 = vld [vmem:[#allocation8 + $0x38] sm:$0xf]
    %v274 = vld [vmem:[#allocation8 + $0x3c] sm:$0xf]
    %v276 = vlaneseq
    %v277 = vshrl.u32 %v276, 7
    %v278 = vsub.s32 0, %v277
    %v279 = vrot.slane %v81, %v278
    %v297 = vunpack.c.l.b16 %v259
    %v298 = vunpack.c.l.b16 %v260
    %v299 = vunpack.c.l.b16 %v261
    %v300 = vunpack.c.l.b16 %v262
    %v301 = vunpack.c.l.b16 %v263
    %v302 = vunpack.c.l.b16 %v264
    %v303 = vunpack.c.l.b16 %v265
    %v304 = vunpack.c.l.b16 %v266
    %v305 = vunpack.c.l.b16 %v267
    %v306 = vunpack.c.l.b16 %v268
    %v307 = vunpack.c.l.b16 %v269
    %v308 = vunpack.c.l.b16 %v270
    %v309 = vunpack.c.l.b16 %v271
    %v310 = vunpack.c.l.b16 %v272
    %v311 = vunpack.c.l.b16 %v273
    %v312 = vunpack.c.l.b16 %v274
    %v313 = vpack.c.b16 %v298, %v297
    %v314 = vpack.c.b16 %v300, %v299
    %v315 = vpack.c.b16 %v302, %v301
    %v316 = vpack.c.b16 %v304, %v303
    %v317 = vpack.c.b16 %v306, %v305
    %v318 = vpack.c.b16 %v308, %v307
    %v319 = vpack.c.b16 %v310, %v309
    %v320 = vpack.c.b16 %v312, %v311
    %329 = vmatprep.subr.bf16.mxu0 0
    %330 = vmatpush1.bf16.msra.mxu0 %v313
    %331 = vmatprep.subr.bf16.mxu0 0
    %332 = vmatpush1.bf16.msra.mxu0 %v314
    %333 = vmatprep.subr.bf16.mxu0 0
    %334 = vmatpush1.bf16.msra.mxu0 %v315
    %335 = vmatprep.subr.bf16.mxu0 0
    %336 = vmatpush1.bf16.msra.mxu0 %v316
    %337 = vmatprep.subr.bf16.mxu0 0
    %338 = vmatpush1.bf16.msra.mxu0 %v317
    %339 = vmatprep.subr.bf16.mxu0 0
    %340 = vmatpush1.bf16.msra.mxu0 %v318
    %341 = vmatprep.subr.bf16.mxu0 0
    %342 = vmatpush1.bf16.msra.mxu0 %v319
    %343 = vmatprep.subr.bf16.mxu0 0
    %344 = vmatpush1.bf16.msra.mxu0 %v320
    %345 = vmatprep.subr.bf16.mxu0 0
    %346 = vmatpush1.bf16.msra.mxu0 0
    %347 = vmatprep.subr.bf16.mxu0 0
    %348 = vmatpush1.bf16.msra.mxu0 0
    %349 = vmatprep.subr.bf16.mxu0 0
    %350 = vmatpush1.bf16.msra.mxu0 0
    %351 = vmatprep.subr.bf16.mxu0 0
    %352 = vmatpush1.bf16.msra.mxu0 0
    %353 = vmatprep.subr.bf16.mxu0 0
    %354 = vmatpush1.bf16.msra.mxu0 0
    %355 = vmatprep.subr.bf16.mxu0 0
    %356 = vmatpush1.bf16.msra.mxu0 0
    %357 = vmatprep.subr.bf16.mxu0 0
    %358 = vmatpush1.bf16.msra.mxu0 0
    %359 = vmatprep.subr.bf16.mxu0 0
    %360 = vmatpush1.bf16.msra.mxu0 0
    %361 = vmatprep.mubr.bf16.mxu0 0
    %362 = vmatmul.mubr.bf16.gmra.mrb[0].mxu0 %v258
    %v363 = vpop.f32.mrb[0].mxu0
    %v364 = vadd.f32 %v279, %v363
    %v365 = vpop.f32.mrb[0].mxu0
    %v366 = vpop.f32.mrb[0].mxu0
    %v367 = vadd.f32 %v279, %v366
    %v368 = vpop.f32.mrb[0].mxu0
    %369 = vdwg.mxu0
    %v370 = vtanh.pop %v364
    %v371 = vtanh.pop %v367
    %372 = vst [vmem:[#allocation10] sm:$0xff] %v370
    %373 = vst [vmem:[#allocation10 + $0x8] sm:$0xff] %v371
    // Predicated region
    $region38: #{tpu_custom_call.1} parent=1 // pred_check
      _
    $region39: #{tpu_custom_call.1} parent=1 // pred_check_branch
      %375 = sbr.rel (0) target = $region41
    $region40: #{tpu_custom_call.1} parent=1 // pred_region
      %s377 = ssub.s32 256, 32
      %378 = vsyncadd [#allocation4], %s377
      %s379 = sshll.u32 [#allocation10], 4
      %s380 = int_to_ptr.vmem [resolvable:$true] %s379
      %385 = dma.vmem_to_hbm [thread:$0]  %s380, 32, %s5, [#allocation4], 32, 32, 2
    $region41: #{tpu_custom_call.1} parent=1 // pred_fallthru
      _
    // Predicated region
    $region42: #{tpu_custom_call.1} parent=1 // pred_check
      _
    $region43: #{tpu_custom_call.1} parent=1 // pred_check_branch
      %387 = sbr.rel (0) target = $region45
    $region44: #{tpu_custom_call.1} parent=1 // pred_region
      %388 = dma.done [#allocation4], 256
    $region45: #{tpu_custom_call.1} parent=1 // pred_fallthru
      _
    %389 = vsyncpa [#allocation3], 1
    %390 = vsyncpa [#allocation6], 1
    %391 = vsyncpa [#allocation9], 1
    %392 = vsyncpa [#allocation4], 1

</llo_original>
